<compile_context>
chip_gen: v5e
topology: v5e:2x2
jax: 0.10.0
libtpu: 0.0.40
codegen_flags: <defaults>
</compile_context>

<pallas_src>
import functools

import jax
import jax.numpy as jnp
from jax import lax
from jax.experimental import pallas as pl
from jax.experimental.pallas import tpu as pltpu

CLASS_NUM = 7  # matches `class_num = 7` in the reference module


def fullmodel_kernel(ids_ref, table_ref, w_ref, b_ref, labels_ref,
                     loss_ref, preds_ref, *, batch, seq_len, class_num):
    vocab = table_ref.shape[0]
    b_pad = preds_ref.shape[0]
    c_pad = w_ref.shape[1]
    n_rows = b_pad * seq_len

    # ---- 1) embedding lookup + mean pool as gather-as-matmul (no scalar loops) ----
    ids_col = ids_ref[...]                                            # (b_pad*S, 1) int32
    vocab_lane = lax.broadcasted_iota(jnp.int32, (n_rows, vocab), 1)
    onehot = (ids_col == vocab_lane).astype(jnp.float32)              # (b_pad*S, V)

    # block-diagonal pooling matrix: pool_mat[b, r] = 1/S if r belongs to batch row b
    rowb = lax.broadcasted_iota(jnp.int32, (b_pad, n_rows), 0)
    colr = lax.broadcasted_iota(jnp.int32, (b_pad, n_rows), 1)
    in_grp = jnp.logical_and(colr >= rowb * seq_len, colr < (rowb + 1) * seq_len)
    pool_mat = jnp.where(in_grp, jnp.float32(1.0 / seq_len), jnp.float32(0.0))

    # counts/S on MXU, then pooled embedding on MXU
    counts = jnp.dot(pool_mat, onehot, preferred_element_type=jnp.float32)        # (b_pad, V)
    pooled = jnp.dot(counts, table_ref[...], preferred_element_type=jnp.float32)  # (b_pad, E)

    # ---- 2) core model: linear head on the MXU ----
    logits = jnp.dot(pooled, w_ref[...], preferred_element_type=jnp.float32) + b_ref[...]

    lane = lax.broadcasted_iota(jnp.int32, (b_pad, c_pad), 1)   # hoisted, reused below
    class_mask = lane < class_num
    masked = jnp.where(class_mask, logits, jnp.float32(-1e30))

    # ---- 3) CrossEntropyLoss (mean reduction over the real batch rows) ----
    row_max = jnp.max(masked, axis=-1, keepdims=True)
    sumexp = jnp.sum(jnp.exp(masked - row_max), axis=-1, keepdims=True)
    lse = row_max + jnp.log(sumexp)
    onehot_lbl = jnp.logical_and(lane == labels_ref[...], class_mask)
    label_logit = jnp.sum(jnp.where(onehot_lbl, logits, 0.0), axis=-1, keepdims=True)
    per_row = lse - label_logit                                       # (b_pad, 1)
    row = lax.broadcasted_iota(jnp.int32, (b_pad, 1), 0)
    row_mask = row < batch
    loss_ref[0] = jnp.sum(jnp.where(row_mask, per_row, 0.0)) * jnp.float32(1.0 / batch)

    # ---- 4) prediction: mimic the reference per-row loop (first argmax, init -1) ----
    is_max = jnp.logical_and(masked == row_max, class_mask)
    first_idx = jnp.min(jnp.where(is_max, lane, c_pad), axis=-1, keepdims=True)
    # reference compares against a running min initialized to -1, so all-logits<=-1 -> -1
    preds_ref[...] = jnp.where(row_max > -1.0, first_idx, jnp.int32(-1))


def full_model_forward(token_ids, labels, table, w, b):
    batch, seq_len = token_ids.shape
    vocab, emb_dim = table.shape
    c_pad = w.shape[1]
    b_pad = 8
    assert batch <= b_pad and w.shape == (emb_dim, c_pad) and b.shape == (c_pad,)

    # glue (host/XLA side): pad batch to 8 sublanes and flatten (b, s) pairs into a
    # (b_pad*S, 1) column of token ids; labels become an (8, 1) int32 column.
    ids_pad = jnp.zeros((b_pad, seq_len), jnp.int32).at[:batch].set(token_ids.astype(jnp.int32))
    ids_col = ids_pad.reshape(b_pad * seq_len, 1)
    labels_col = jnp.zeros((b_pad, 1), jnp.int32).at[:batch, 0].set(labels.astype(jnp.int32))
    bias2d = b.reshape(1, c_pad)

    kernel = functools.partial(fullmodel_kernel, batch=batch,
                               seq_len=seq_len, class_num=CLASS_NUM)

    loss_arr, preds_arr = pl.pallas_call(
        kernel,
        out_shape=(jax.ShapeDtypeStruct((1,), jnp.float32),
                   jax.ShapeDtypeStruct((b_pad, 1), jnp.int32)),
        in_specs=[
            pl.BlockSpec(memory_space=pltpu.MemorySpace.VMEM),   # flattened token ids
            pl.BlockSpec(memory_space=pltpu.MemorySpace.VMEM),   # embedding table
            pl.BlockSpec(memory_space=pltpu.MemorySpace.VMEM),   # W
            pl.BlockSpec(memory_space=pltpu.MemorySpace.VMEM),   # bias (1, C_pad)
            pl.BlockSpec(memory_space=pltpu.MemorySpace.VMEM),   # labels column
        ],
        out_specs=(pl.BlockSpec(memory_space=pltpu.MemorySpace.SMEM),   # scalar loss
                   pl.BlockSpec(memory_space=pltpu.MemorySpace.VMEM)),  # preds column
    )(ids_col, table, w, bias2d, labels_col)

    # TODO(synk): for a real (large) vocabulary on v7x, keep the table in HBM
    # (memory_space=pl.ANY) and DMA only touched rows instead of VMEM residency.
    return {"output": preds_arr[:batch, 0], "loss": loss_arr[0]}


def _reference(token_ids, labels, table, w, b):
    # pure-JAX reference of the same synthetic embedding + linear + CE + argmax
    emb = jnp.mean(table[token_ids], axis=1)                   # (B, E)
    logits = emb @ w + b                                       # (B, C_pad)
    logits = logits[:, :CLASS_NUM]
    logp = jax.nn.log_softmax(logits, axis=-1)
    loss = -jnp.mean(logp[jnp.arange(labels.shape[0]), labels])
    preds = jnp.argmax(logits, axis=-1)
    return preds, loss


if __name__ == "__main__":
    key = jax.random.PRNGKey(0)
    k_ids, k_lab, k_tab, k_w = jax.random.split(key, 4)

    B, S, V, E, C_PAD = 4, 8, 32, 128, 128

    token_ids = jax.random.randint(k_ids, (B, S), 0, V, dtype=jnp.int32)
    labels = jax.random.randint(k_lab, (B,), 0, CLASS_NUM, dtype=jnp.int32)

    # deterministic synthetic parameters (embedding table + linear "core" head)
    table = jax.random.normal(k_tab, (V, E), dtype=jnp.float32) * 0.02
    w = jax.random.normal(k_w, (E, C_PAD), dtype=jnp.float32) * 0.02
    b = jnp.zeros((C_PAD,), jnp.float32)

    out = full_model_forward(token_ids, labels, table, w, b)
    jax.block_until_ready(out["loss"])
    jax.block_until_ready(out["output"])

    ref_preds, ref_loss = _reference(token_ids, labels, table, w, b)
    assert jnp.allclose(out["loss"], ref_loss, atol=1e-4), (out["loss"], ref_loss)
    assert jnp.all(out["output"] == ref_preds), (out["output"], ref_preds)

    print("KERNEL_OK")
</pallas_src>

<mosaic_0001>
module attributes {stable_mosaic.version = 11 : i64} {
  func.func @fullmodel_kernel(%arg0: memref<64x1xi32, #tpu.memory_space<vmem>>, %arg1: memref<32x128xf32, #tpu.memory_space<vmem>>, %arg2: memref<128x128xf32, #tpu.memory_space<vmem>>, %arg3: memref<1x128xf32, #tpu.memory_space<vmem>>, %arg4: memref<8x1xi32, #tpu.memory_space<vmem>>, %arg5: memref<1xf32, #tpu.memory_space<smem>>, %arg6: memref<8x1xi32, #tpu.memory_space<vmem>>) attributes {dimension_semantics = [], scalar_prefetch = 0 : i64, scratch_operands = 0 : i64, tpu.core_type = #tpu.core_type<tc>} {
    %c0 = arith.constant 0 : index
    %c0_0 = arith.constant 0 : index
    %0 = vector.load %arg0[%c0, %c0_0] : memref<64x1xi32, #tpu.memory_space<vmem>>, vector<64x1xi32>
    %1 = tpu.iota {dimensions = array<i32: 1>} : vector<64x32xi32>
    %2 = vector.broadcast %0 : vector<64x1xi32> to vector<64x32xi32>
    %3 = arith.cmpi eq, %2, %1 : vector<64x32xi32>
    %4 = arith.extui %3 : vector<64x32xi1> to vector<64x32xi32>
    %5 = arith.sitofp %4 : vector<64x32xi32> to vector<64x32xf32>
    %6 = tpu.iota {dimensions = array<i32: 0>} : vector<8x64xi32>
    %7 = tpu.iota {dimensions = array<i32: 1>} : vector<8x64xi32>
    %c8_i32 = arith.constant 8 : i32
    %8 = vector.broadcast %c8_i32 : i32 to vector<8x64xi32>
    %9 = arith.muli %6, %8 : vector<8x64xi32>
    %10 = arith.cmpi sge, %7, %9 : vector<8x64xi32>
    %c1_i32 = arith.constant 1 : i32
    %11 = vector.broadcast %c1_i32 : i32 to vector<8x64xi32>
    %12 = arith.addi %6, %11 : vector<8x64xi32>
    %c8_i32_1 = arith.constant 8 : i32
    %13 = vector.broadcast %c8_i32_1 : i32 to vector<8x64xi32>
    %14 = arith.muli %12, %13 : vector<8x64xi32>
    %15 = arith.cmpi slt, %7, %14 : vector<8x64xi32>
    %16 = arith.andi %10, %15 : vector<8x64xi1>
    %cst = arith.constant 1.250000e-01 : f32
    %cst_2 = arith.constant 0.000000e+00 : f32
    %17 = vector.broadcast %cst : f32 to vector<8x64xf32>
    %18 = vector.broadcast %cst_2 : f32 to vector<8x64xf32>
    %19 = arith.select %16, %17, %18 : vector<8x64xi1>, vector<8x64xf32>
    %cst_3 = arith.constant dense<0.000000e+00> : vector<8x32xf32>
    %20 = tpu.matmul %19, %5, %cst_3 {dimension_numbers = #tpu.dot_dimension_numbers<[1], [0], [0], [1], [0, 0, 1, 1], [], []>} : vector<8x64xf32>, vector<64x32xf32>, vector<8x32xf32> -> vector<8x32xf32>
    %c0_4 = arith.constant 0 : index
    %c0_5 = arith.constant 0 : index
    %21 = vector.load %arg1[%c0_4, %c0_5] : memref<32x128xf32, #tpu.memory_space<vmem>>, vector<32x128xf32>
    %cst_6 = arith.constant dense<0.000000e+00> : vector<8x128xf32>
    %22 = tpu.matmul %20, %21, %cst_6 {dimension_numbers = #tpu.dot_dimension_numbers<[1], [0], [0], [1], [0, 0, 1, 1], [], []>} : vector<8x32xf32>, vector<32x128xf32>, vector<8x128xf32> -> vector<8x128xf32>
    %c0_7 = arith.constant 0 : index
    %c0_8 = arith.constant 0 : index
    %23 = vector.load %arg2[%c0_7, %c0_8] : memref<128x128xf32, #tpu.memory_space<vmem>>, vector<128x128xf32>
    %cst_9 = arith.constant dense<0.000000e+00> : vector<8x128xf32>
    %24 = tpu.matmul %22, %23, %cst_9 {dimension_numbers = #tpu.dot_dimension_numbers<[1], [0], [0], [1], [0, 0, 1, 1], [], []>} : vector<8x128xf32>, vector<128x128xf32>, vector<8x128xf32> -> vector<8x128xf32>
    %c0_10 = arith.constant 0 : index
    %c0_11 = arith.constant 0 : index
    %25 = vector.load %arg3[%c0_10, %c0_11] : memref<1x128xf32, #tpu.memory_space<vmem>>, vector<1x128xf32>
    %26 = vector.broadcast %25 : vector<1x128xf32> to vector<8x128xf32>
    %27 = arith.addf %24, %26 : vector<8x128xf32>
    %28 = tpu.iota {dimensions = array<i32: 1>} : vector<8x128xi32>
    %c7_i32 = arith.constant 7 : i32
    %29 = vector.broadcast %c7_i32 : i32 to vector<8x128xi32>
    %30 = arith.cmpi slt, %28, %29 : vector<8x128xi32>
    %cst_12 = arith.constant -1.000000e+30 : f32
    %31 = vector.broadcast %cst_12 : f32 to vector<8x128xf32>
    %32 = arith.select %30, %27, %31 : vector<8x128xi1>, vector<8x128xf32>
    %cst_13 = arith.constant dense<0xFF800000> : vector<8xf32>
    %33 = vector.multi_reduction <maximumf>, %32, %cst_13 [1] : vector<8x128xf32> to vector<8xf32>
    %34 = vector.shape_cast %33 : vector<8xf32> to vector<8x1xf32>
    %35 = vector.broadcast %34 : vector<8x1xf32> to vector<8x128xf32>
    %36 = arith.subf %32, %35 : vector<8x128xf32>
    %37 = math.exp %36 : vector<8x128xf32>
    %cst_14 = arith.constant dense<0.000000e+00> : vector<8xf32>
    %38 = vector.multi_reduction <add>, %37, %cst_14 [1] : vector<8x128xf32> to vector<8xf32>
    %39 = vector.shape_cast %38 : vector<8xf32> to vector<8x1xf32>
    %40 = math.log %39 : vector<8x1xf32>
    %41 = arith.addf %34, %40 : vector<8x1xf32>
    %c0_15 = arith.constant 0 : index
    %c0_16 = arith.constant 0 : index
    %42 = vector.load %arg4[%c0_15, %c0_16] : memref<8x1xi32, #tpu.memory_space<vmem>>, vector<8x1xi32>
    %43 = vector.broadcast %42 : vector<8x1xi32> to vector<8x128xi32>
    %44 = arith.cmpi eq, %28, %43 : vector<8x128xi32>
    %45 = arith.andi %44, %30 : vector<8x128xi1>
    %cst_17 = arith.constant 0.000000e+00 : f32
    %46 = vector.broadcast %cst_17 : f32 to vector<8x128xf32>
    %47 = arith.select %45, %27, %46 : vector<8x128xi1>, vector<8x128xf32>
    %cst_18 = arith.constant dense<0.000000e+00> : vector<8xf32>
    %48 = vector.multi_reduction <add>, %47, %cst_18 [1] : vector<8x128xf32> to vector<8xf32>
    %49 = vector.shape_cast %48 : vector<8xf32> to vector<8x1xf32>
    %50 = arith.subf %41, %49 : vector<8x1xf32>
    %51 = tpu.iota {dimensions = array<i32: 0>} : vector<8x1xi32>
    %c4_i32 = arith.constant 4 : i32
    %52 = vector.broadcast %c4_i32 : i32 to vector<8x1xi32>
    %53 = arith.cmpi slt, %51, %52 : vector<8x1xi32>
    %cst_19 = arith.constant 0.000000e+00 : f32
    %54 = vector.broadcast %cst_19 : f32 to vector<8x1xf32>
    %55 = arith.select %53, %50, %54 : vector<8x1xi1>, vector<8x1xf32>
    %56 = vector.shape_cast %55 : vector<8x1xf32> to vector<1x8x1xf32>
    %cst_20 = arith.constant dense<0.000000e+00> : vector<1xf32>
    %57 = vector.multi_reduction <add>, %56, %cst_20 [1, 2] : vector<1x8x1xf32> to vector<1xf32>
    %58 = vector.shape_cast %57 : vector<1xf32> to vector<1x1x1xf32>
    %59 = vector.extract %58[0, 0, 0] : f32 from vector<1x1x1xf32>
    %cst_21 = arith.constant 2.500000e-01 : f32
    %60 = arith.mulf %59, %cst_21 : f32
    %c0_22 = arith.constant 0 : index
    %61 = memref.load %arg5[%c0_22] : memref<1xf32, #tpu.memory_space<smem>>
    memref.store %60, %arg5[%c0_22] : memref<1xf32, #tpu.memory_space<smem>>
    %62 = vector.broadcast %34 : vector<8x1xf32> to vector<8x128xf32>
    %63 = arith.cmpf oeq, %32, %62 : vector<8x128xf32>
    %64 = arith.andi %63, %30 : vector<8x128xi1>
    %c128_i32 = arith.constant 128 : i32
    %65 = vector.broadcast %c128_i32 : i32 to vector<8x128xi32>
    %66 = arith.select %64, %28, %65 : vector<8x128xi1>, vector<8x128xi32>
    %cst_23 = arith.constant dense<2147483647> : vector<8xi32>
    %67 = vector.multi_reduction <minsi>, %66, %cst_23 [1] : vector<8x128xi32> to vector<8xi32>
    %68 = vector.shape_cast %67 : vector<8xi32> to vector<8x1xi32>
    %cst_24 = arith.constant -1.000000e+00 : f32
    %69 = vector.broadcast %cst_24 : f32 to vector<8x1xf32>
    %70 = arith.cmpf ogt, %34, %69 : vector<8x1xf32>
    %c-1_i32 = arith.constant -1 : i32
    %71 = vector.broadcast %c-1_i32 : i32 to vector<8x1xi32>
    %72 = arith.select %70, %68, %71 : vector<8x1xi1>, vector<8x1xi32>
    %c0_25 = arith.constant 0 : index
    %c0_26 = arith.constant 0 : index
    %73 = vector.load %arg6[%c0_25, %c0_26] : memref<8x1xi32, #tpu.memory_space<vmem>>, vector<8x1xi32>
    tpu.vector_store %arg6[%c0_25, %c0_26], %72 {strides = array<i32>} : memref<8x1xi32, #tpu.memory_space<vmem>>, vector<8x1xi32>,
    return
  }
}

</mosaic_0001>

<llo_original>
// kernel: tpu_custom_call.1
$region0: #{tpu_custom_call.1}
  #allocation0 [shape = 'u32[]', space=smem, size = 0x4, offset = 0x4, fixed_abs, tag = 'smem constant byte address 0x4 - core index']
  #allocation1 [shape = 'u32[72,128]{1,0:T(1,128)}', space=vmem, size = 0x9000, scoped, tag = 'internal scratch']
  %s0 = inlined_call_operand.vmem [shape: s32[64,1], index: 0, kind: input, shape index: {}]
  %s1 = inlined_call_operand.vmem [shape: f32[32,128], index: 1, kind: input, shape index: {}]
  %s2 = inlined_call_operand.hbm [shape: f32[128,128], index: 2, kind: input, shape index: {}]
  %s3 = inlined_call_operand.vmem [shape: f32[1,128], index: 3, kind: input, shape index: {}]
  %s4 = inlined_call_operand.vmem [shape: s32[8,1], index: 4, kind: input, shape index: {}]
  %s5 = inlined_call_operand.hbm [shape: f32[1], index: 5, kind: output, shape index: {0}]
  %s6 = inlined_call_operand.vmem [shape: s32[8,1], index: 6, kind: output, shape index: {1}]
  %7 = xla_tuple %s5, %s6
  %s8 = sld [smem:[#allocation0]]
  $region42: #{tpu_custom_call.1} parent=0
    _
  %s10 = ssub.s32 1, %s8
  %s11 = scalar_select 0, %s10, %s8
  $region1: #{tpu_custom_call.1} parent=0
    #allocation2 [shape = 'u8[65536]{0}', space=vmem, size = 0x10000, scoped, tag = 'input window, operand 2, single buffered']
    #allocation3 [shape = 's32[1]{0}', space=sflag, size = 0x4, scoped, tag = 'scoped memory for tpu_custom_call.1']
    #allocation4 [shape = 's32[1]{0}', space=sflag, size = 0x4, scoped, tag = 'scoped memory for tpu_custom_call.1']
    #allocation5 [shape = 'u8[512]{0}', space=smem, size = 0x200, scoped, tag = 'output window, operand 0, single buffered']
    %12 = vsyncpa [#allocation3], 0
    %13 = vsyncpa [#allocation4], 0
    // Predicated region
    $region2: #{tpu_custom_call.1} parent=1 // pred_check
      _
    $region3: #{tpu_custom_call.1} parent=1 // pred_check_branch
      %15 = sbr.rel (0) target = $region5
    $region4: #{tpu_custom_call.1} parent=1 // pred_region
      _
    $region5: #{tpu_custom_call.1} parent=1 // pred_fallthru
      _
    // Predicated region
    $region6: #{tpu_custom_call.1} parent=1 // pred_check
      _
    $region7: #{tpu_custom_call.1} parent=1 // pred_check_branch
      %17 = sbr.rel (0) target = $region9
    $region8: #{tpu_custom_call.1} parent=1 // pred_region
      _
    $region9: #{tpu_custom_call.1} parent=1 // pred_fallthru
      _
    // Predicated region
    $region10: #{tpu_custom_call.1} parent=1 // pred_check
      _
    $region11: #{tpu_custom_call.1} parent=1 // pred_check_branch
      %19 = sbr.rel (0) target = $region13
    $region12: #{tpu_custom_call.1} parent=1 // pred_region
      %21 = vsyncadd [#allocation3], 0
      %s22 = sshll.u32 %s2, 4
      %s23 = int_to_ptr.hbm [resolvable:$true] %s22
      %s24 = sshll.u32 [#allocation2], 4
      %s25 = int_to_ptr.vmem [resolvable:$true] %s24
      %30 = dma.hbm_to_vmem [thread:$0]  %s23, 2048, %s25, [#allocation3], 128, 128, 8
    $region13: #{tpu_custom_call.1} parent=1 // pred_fallthru
      _
    // Predicated region
    $region14: #{tpu_custom_call.1} parent=1 // pred_check
      _
    $region15: #{tpu_custom_call.1} parent=1 // pred_check_branch
      %32 = sbr.rel (0) target = $region17
    $region16: #{tpu_custom_call.1} parent=1 // pred_region
      _
    $region17: #{tpu_custom_call.1} parent=1 // pred_fallthru
      _
    // Predicated region
    $region18: #{tpu_custom_call.1} parent=1 // pred_check
      _
    $region19: #{tpu_custom_call.1} parent=1 // pred_check_branch
      %34 = sbr.rel (0) target = $region21
    $region20: #{tpu_custom_call.1} parent=1 // pred_region
      _
    $region21: #{tpu_custom_call.1} parent=1 // pred_fallthru
      _
    // Predicated region
    $region22: #{tpu_custom_call.1} parent=1 // pred_check
      _
    $region23: #{tpu_custom_call.1} parent=1 // pred_check_branch
      %36 = sbr.rel (0) target = $region25
    $region24: #{tpu_custom_call.1} parent=1 // pred_region
      %38 = dma.done [#allocation3], 2048
    $region25: #{tpu_custom_call.1} parent=1 // pred_fallthru
      _
    %v39 = vld [vmem:[%s0] sm:$0xff]
    %v40 = vld [vmem:[%s0 + $0x8] sm:$0xff]
    %v41 = vld [vmem:[%s0 + $0x10] sm:$0xff]
    %v42 = vld [vmem:[%s0 + $0x18] sm:$0xff]
    %v43 = vld [vmem:[%s0 + $0x20] sm:$0xff]
    %v44 = vld [vmem:[%s0 + $0x28] sm:$0xff]
    %v45 = vld [vmem:[%s0 + $0x30] sm:$0xff]
    %v46 = vld [vmem:[%s0 + $0x38] sm:$0xff]
    %v47 = vlaneseq
    %v48 = vand.u32 %v47, 127
    %49 = vset.pattern.permute.xlu0 0
    %50 = vperm.xlu0 %49, %v39
    %v51 = vpop.permute.xlu0 %50
    %52 = vset.pattern.permute.xlu0 0
    %53 = vperm.xlu0 %52, %v40
    %v54 = vpop.permute.xlu0 %53
    %55 = vset.pattern.permute.xlu0 0
    %56 = vperm.xlu0 %55, %v41
    %v57 = vpop.permute.xlu0 %56
    %58 = vset.pattern.permute.xlu0 0
    %59 = vperm.xlu0 %58, %v42
    %v60 = vpop.permute.xlu0 %59
    %61 = vset.pattern.permute.xlu0 0
    %62 = vperm.xlu0 %61, %v43
    %v63 = vpop.permute.xlu0 %62
    %64 = vset.pattern.permute.xlu0 0
    %65 = vperm.xlu0 %64, %v44
    %v66 = vpop.permute.xlu0 %65
    %67 = vset.pattern.permute.xlu0 0
    %68 = vperm.xlu0 %67, %v45
    %v69 = vpop.permute.xlu0 %68
    %70 = vset.pattern.permute.xlu0 0
    %71 = vperm.xlu0 %70, %v46
    %v72 = vpop.permute.xlu0 %71
    %vm73 = vcmp.eq.s32.totalorder %v51, %v48
    %vm74 = vcmp.eq.s32.totalorder %v54, %v48
    %vm75 = vcmp.eq.s32.totalorder %v57, %v48
    %vm76 = vcmp.eq.s32.totalorder %v60, %v48
    %vm77 = vcmp.eq.s32.totalorder %v63, %v48
    %vm78 = vcmp.eq.s32.totalorder %v66, %v48
    %vm79 = vcmp.eq.s32.totalorder %v69, %v48
    %vm80 = vcmp.eq.s32.totalorder %v72, %v48
    %v81 = vsel %vm73, 1, 0
    %v82 = vsel %vm74, 1, 0
    %v83 = vsel %vm75, 1, 0
    %v84 = vsel %vm76, 1, 0
    %v85 = vsel %vm77, 1, 0
    %v86 = vsel %vm78, 1, 0
    %v87 = vsel %vm79, 1, 0
    %v88 = vsel %vm80, 1, 0
    %v89 = vcvt.s32.f32 %v81
    %v90 = vcvt.s32.f32 %v82
    %v91 = vcvt.s32.f32 %v83
    %v92 = vcvt.s32.f32 %v84
    %v93 = vcvt.s32.f32 %v85
    %v94 = vcvt.s32.f32 %v86
    %v95 = vcvt.s32.f32 %v87
    %v96 = vcvt.s32.f32 %v88
    %v97 = vlaneseq
    %v98 = vshrl.u32 %v97, 7
    %v99 = vmul.u32 %v98, 8
    %vm100 = vcmp.ge.s32.totalorder %v48, %v99
    %v101 = vadd.s32 %v98, 1
    %v102 = vmul.u32 %v101, 8
    %vm103 = vcmp.lt.s32.totalorder %v48, %v102
    %vm104 = vmand %vm100, %vm103
    %v105 = vsel %vm104, 0.125, 0.0
    %vm106 = vcmask 523264
    %v108 = vsel %vm106, %v105, 0
    %110 = vmatpush.msra.mxu0 0.0
    %111 = vmatpush.msra.mxu0 0.0
    %112 = vmatpush.msra.mxu0 0.0
    %113 = vmatpush.msra.mxu0 0.0
    %114 = vmatpush.msra.mxu0 0.0
    %115 = vmatpush.msra.mxu0 0.0
    %116 = vmatpush.msra.mxu0 0.0
    %117 = vmatpush.msra.mxu0 0.0
    %118 = vmatpush.msra.mxu0 %v96
    %119 = vmatpush.msra.mxu0 %v95
    %120 = vmatpush.msra.mxu0 %v94
    %121 = vmatpush.msra.mxu0 %v93
    %122 = vmatpush.msra.mxu0 %v92
    %123 = vmatpush.msra.mxu0 %v91
    %124 = vmatpush.msra.mxu0 %v90
    %125 = vmatpush.msra.mxu0 %v89
    %126 = vmatmul.f32.gmra.mxu0 %v108
    %v127 = vpop.f32.mrf.mxu0
    %v128 = vadd.f32 0.0, %v127
    %129 = vdwg.mxu0
    %v130 = vld [vmem:[%s1] sm:$0xff]
    %v131 = vld [vmem:[%s1 + $0x8] sm:$0xff]
    %v132 = vld [vmem:[%s1 + $0x10] sm:$0xff]
    %v133 = vld [vmem:[%s1 + $0x18] sm:$0xff]
    %vm134 = vcmask 261120
    %v136 = vsel %vm134, %v128, 0
    %138 = vmatpush.msra.mxu0 0.0
    %139 = vmatpush.msra.mxu0 0.0
    %140 = vmatpush.msra.mxu0 0.0
    %141 = vmatpush.msra.mxu0 0.0
    %142 = vmatpush.msra.mxu0 0.0
    %143 = vmatpush.msra.mxu0 0.0
    %144 = vmatpush.msra.mxu0 0.0
    %145 = vmatpush.msra.mxu0 0.0
    %146 = vmatpush.msra.mxu0 0.0
    %147 = vmatpush.msra.mxu0 0.0
    %148 = vmatpush.msra.mxu0 0.0
    %149 = vmatpush.msra.mxu0 0.0
    %150 = vmatpush.msra.mxu0 %v133
    %151 = vmatpush.msra.mxu0 %v132
    %152 = vmatpush.msra.mxu0 %v131
    %153 = vmatpush.msra.mxu0 %v130
    %154 = vmatmul.f32.gmra.mxu0 %v136
    %v155 = vpop.f32.mrf.mxu0
    %v156 = vadd.f32 0.0, %v155
    %157 = vdwg.mxu0
    %v158 = vld [vmem:[#allocation2] sm:$0xff]
    %v159 = vld [vmem:[#allocation2 + $0x8] sm:$0xff]
    %v160 = vld [vmem:[#allocation2 + $0x10] sm:$0xff]
    %v161 = vld [vmem:[#allocation2 + $0x18] sm:$0xff]
    %v162 = vld [vmem:[#allocation2 + $0x20] sm:$0xff]
    %v163 = vld [vmem:[#allocation2 + $0x28] sm:$0xff]
    %v164 = vld [vmem:[#allocation2 + $0x30] sm:$0xff]
    %v165 = vld [vmem:[#allocation2 + $0x38] sm:$0xff]
    %v166 = vld [vmem:[#allocation2 + $0x40] sm:$0xff]
    %v167 = vld [vmem:[#allocation2 + $0x48] sm:$0xff]
    %v168 = vld [vmem:[#allocation2 + $0x50] sm:$0xff]
    %v169 = vld [vmem:[#allocation2 + $0x58] sm:$0xff]
    %v170 = vld [vmem:[#allocation2 + $0x60] sm:$0xff]
    %v171 = vld [vmem:[#allocation2 + $0x68] sm:$0xff]
    %v172 = vld [vmem:[#allocation2 + $0x70] sm:$0xff]
    %v173 = vld [vmem:[#allocation2 + $0x78] sm:$0xff]
    %v174 = vld [vmem:[%s3] sm:$0x1]
    %v176 = vperm.slane %v174, 0
    %178 = vmatpush.msra.mxu0 %v173
    %179 = vmatpush.msra.mxu0 %v172
    %180 = vmatpush.msra.mxu0 %v171
    %181 = vmatpush.msra.mxu0 %v170
    %182 = vmatpush.msra.mxu0 %v169
    %183 = vmatpush.msra.mxu0 %v168
    %184 = vmatpush.msra.mxu0 %v167
    %185 = vmatpush.msra.mxu0 %v166
    %186 = vmatpush.msra.mxu0 %v165
    %187 = vmatpush.msra.mxu0 %v164
    %188 = vmatpush.msra.mxu0 %v163
    %189 = vmatpush.msra.mxu0 %v162
    %190 = vmatpush.msra.mxu0 %v161
    %191 = vmatpush.msra.mxu0 %v160
    %192 = vmatpush.msra.mxu0 %v159
    %193 = vmatpush.msra.mxu0 %v158
    %194 = vmatmul.f32.gmra.mxu0 %v156
    %v195 = vpop.f32.mrf.mxu0
    %v196 = vadd.f32 %v176, %v195
    %197 = vdwg.mxu0
    %vm198 = vcmp.lt.s32.totalorder %v48, 7
    %v199 = vsel %vm198, %v196, -1e+30
    %200 = vmax.xlane.f32.xlu0 %v199
    %v201 = vpop.xlane.xlu0 %200
    %v202 = vsub.f32 %v199, %v201
    %v203 = vmul.f32 %v202, 1.442695
    %v204 = vpow.pop %v203
    %205 = vadd.xlane.f32.xlu0 %v204
    %v206 = vpop.xlane.xlu0 %205
    %v207 = vlog2.pop %v206
    %v208 = vmul.f32 %v207, 0.6931472
    %v209 = vadd.f32 %v201, %v208
    %v210 = vld [vmem:[%s4] sm:$0xff]
    %211 = vset.pattern.permute.xlu0 0
    %212 = vperm.xlu0 %211, %v210
    %v213 = vpop.permute.xlu0 %212
    %vm214 = vcmp.eq.s32.totalorder %v48, %v213
    %vm215 = vmand %vm214, %vm198
    %v216 = vsel %vm215, %v196, 0.0
    %217 = vadd.xlane.f32.xlu0 %v216
    %v218 = vpop.xlane.xlu0 %217
    %v219 = vsub.f32 %v209, %v218
    %vm220 = vcmp.lt.s32.totalorder %v98, 4
    %v221 = vsel %vm220, %v219, 0.0
    %vm222 = vcmask 7168
    %v223 = vsel %vm222, %v221, 0.0
    %224 = vadd.xlane.f32.xlu0 %v223
    %v225 = vpop.xlane.xlu0 %224
    %v226 = vrot.slane %v225, 4
    %v227 = vadd.f32 %v225, %v226
    %v228 = vrot.slane %v227, 2
    %v229 = vadd.f32 %v227, %v228
    %v230 = vrot.slane %v229, 1
    %v231 = vadd.f32 %v229, %v230
    %s232 = vtos %v231
    %s233 = smul.f32 %s232, 0.25
    %s234 = scalar_lea.smem [#allocation5], 0
    %235 = sst [smem:[%s234]] %s233
    %vm236 = vcmp.eq.f32.partialorder %v199, %v201
    %vm237 = vmand %vm236, %vm198
    %v238 = vsel %vm237, %v48, 128
    %v239 = vand.u32 %v238, 65535
    %v240 = vshra.s32 %v238, 16
    %v241 = vcvt.s32.f32 %v239
    %v242 = vcvt.s32.f32 %v240
    %243 = vmin.xlane.f32.xlu0 %v242
    %v244 = vpop.xlane.xlu0 %243
    %vm245 = vcmp.eq.f32.partialorder %v242, %v244
    %v246 = vsel %vm245, %v241, inf
    %247 = vmin.xlane.f32.xlu0 %v246
    %v248 = vpop.xlane.xlu0 %247
    %v249 = vcvt.f32.s32 %v248
    %v250 = vcvt.f32.s32 %v244
    %v251 = vshll.u32 %v250, 16
    %v252 = vadd.s32 %v251, %v249
    %vm253 = vcmp.gt.f32.partialorder %v201, -1.0
    %v254 = vsel %vm253, %v252, 4294967295
    %255 = vst.msk [vmem:[%s6] sm:$0xff] %vm222, %v254
    // Predicated region
    $region26: #{tpu_custom_call.1} parent=1 // pred_check
      _
    $region27: #{tpu_custom_call.1} parent=1 // pred_check_branch
      %257 = sbr.rel (0) target = $region29
    $region28: #{tpu_custom_call.1} parent=1 // pred_region
      %259 = vsyncadd [#allocation4], 0
      %s261 = sshll.u32 %s5, 4
      %s262 = int_to_ptr.hbm [resolvable:$true] %s261
      %264 = dma.smem_to_hbm [#allocation5], 16, %s262, [#allocation4]
    $region29: #{tpu_custom_call.1} parent=1 // pred_fallthru
      _
    // Predicated region
    $region30: #{tpu_custom_call.1} parent=1 // pred_check
      _
    $region31: #{tpu_custom_call.1} parent=1 // pred_check_branch
      %266 = sbr.rel (0) target = $region33
    $region32: #{tpu_custom_call.1} parent=1 // pred_region
      _
    $region33: #{tpu_custom_call.1} parent=1 // pred_fallthru
      _
    // Predicated region
    $region34: #{tpu_custom_call.1} parent=1 // pred_check
      _
    $region35: #{tpu_custom_call.1} parent=1 // pred_check_branch
      %268 = sbr.rel (0) target = $region37
    $region36: #{tpu_custom_call.1} parent=1 // pred_region
      %270 = dma.done [#allocation4], 16
    $region37: #{tpu_custom_call.1} parent=1 // pred_fallthru
      _
    // Predicated region
    $region38: #{tpu_custom_call.1} parent=1 // pred_check
      _
    $region39: #{tpu_custom_call.1} parent=1 // pred_check_branch
      %272 = sbr.rel (0) target = $region41
    $region40: #{tpu_custom_call.1} parent=1 // pred_region
      _
    $region41: #{tpu_custom_call.1} parent=1 // pred_fallthru
      _
    %273 = sfence
    %274 = vsyncpa [#allocation3], 1
    %275 = vsyncpa [#allocation4], 1

</llo_original>
